<compile_context>
chip_gen: v5e
topology: v5e:2x2
jax: 0.10.0
libtpu: 0.0.40
codegen_flags: <defaults>
</compile_context>

<pallas_src>
import math
from functools import partial

import jax
import jax.numpy as jnp
from jax import lax
from jax.experimental import pallas as pl
from jax.experimental.pallas import tpu as pltpu

_INV_SQRT2 = 1.0 / math.sqrt(2.0)


def _gelu_exact(h):
    # Exact (erf-based) GELU == nn.GELU() default.  f32 erf runs on the EUP slot.
    return 0.5 * h * (1.0 + lax.erf(h * _INV_SQRT2))


def _mlp_head_kernel(x_ref, w1_ref, b1_ref, w2_ref, b2_ref, o_ref, *, tok_in_block):
    """x_ref: (tb, sb, E) input dtype, w1_ref: (E, H) bf16, b1_ref: (1, H) f32,
    w2_ref: (H, Opad) bf16, b2_ref: (1, Opad) f32, o_ref: (tb, Opad) f32."""
    # Token select: static row inside the DMA'd seq window; cast only this tiny
    # (tb, E) tile to bf16 for the MXU (no wrapper-side full-tensor cast).
    x = x_ref[:, tok_in_block, :].astype(w1_ref.dtype)            # (tb, E) bf16

    # linear1 on the MXU: bf16 x bf16 -> f32 accumulation.
    h = jnp.dot(x, w1_ref[...], preferred_element_type=jnp.float32) + b1_ref[...]

    # GELU in f32 (v5e has no bf16 VPU/EUP path; erf is effectively free next to MXU work).
    h = _gelu_exact(h)

    # linear2 on the MXU; re-quantize the intermediate to bf16 for the MXU inputs.
    out = jnp.dot(h.astype(w2_ref.dtype), w2_ref[...],
                  preferred_element_type=jnp.float32) + b2_ref[...]

    o_ref[...] = out.astype(o_ref.dtype)


def prepare_params(w1, b1, w2, b2):
    """One-time parameter conversion, run OUTSIDE the per-call jitted path.

    bf16 weights (MXU-native), f32 biases reshaped to (1, dim), logits dim
    zero-padded to a multiple of 128 so the kernel's output store is lane-dense.
    Returns ((w1, b1, w2, b2), out_dim).
    """
    out_dim = w2.shape[1]
    o_pad = pl.cdiv(out_dim, 128) * 128
    w1 = jnp.asarray(w1, jnp.bfloat16)
    w2 = jnp.asarray(w2, jnp.bfloat16)
    b1 = jnp.asarray(b1, jnp.float32).reshape(1, -1)
    b2 = jnp.asarray(b2, jnp.float32).reshape(1, -1)
    if o_pad != out_dim:
        w2 = jnp.pad(w2, ((0, 0), (0, o_pad - out_dim)))
        b2 = jnp.pad(b2, ((0, 0), (0, o_pad - out_dim)))
    return (w1, b1, w2, b2), out_dim


@partial(jax.jit, static_argnames=("output_token_idx", "out_dim", "block_b"))
def frame_classification_head(x, w1, b1, w2, b2, *, output_token_idx, out_dim,
                              block_b=None):
    """x: (B, S, E); params pre-converted by prepare_params.
    Returns float32 logits of shape (B, out_dim)."""
    B, S, E = x.shape
    H = w1.shape[1]
    o_pad = w2.shape[1]
    assert b2.shape[1] == o_pad and out_dim <= o_pad

    # Normalize PyTorch-style negative indexing before deriving the seq window.
    idx = output_token_idx % S

    # Seq window: smallest tileable block containing the output token so the
    # per-tile DMA pulls <= 16 seq rows (never the whole sequence).
    if x.dtype == jnp.bfloat16 and S % 16 == 0:
        sb, seq_block_idx, tok_in_block = 16, idx // 16, idx % 16   # native bf16 (16,128) tile
    elif S % 8 == 0:
        sb, seq_block_idx, tok_in_block = 8, idx // 8, idx % 8
    else:
        # Non-tileable seq length: select the single token row in the wrapper
        # (reads only B*E elements) instead of DMA'ing the whole sequence.
        x = lax.slice_in_dim(x, idx, idx + 1, axis=1)               # (B, 1, E)
        sb, seq_block_idx, tok_in_block = 1, 0, 0

    # Batch tile: 128 on v5e (4x128 MXU, 1 vst slot), 256 on v6e/v7x; split so
    # the grid has >= 2 blocks when possible (keeps both v7x TensorCores busy).
    if block_b is None:
        kind = jax.devices()[0].device_kind.lower()
        block_b = 128 if "v5" in kind else 256
    if 8 < B <= block_b:
        tb = min(block_b, max(8, pl.cdiv(pl.cdiv(B, 2), 8) * 8))
    else:
        tb = min(B, block_b)
    grid = (pl.cdiv(B, tb),)

    # Scoped-VMEM budget: resident bf16 weights + double-buffered x/output tiles
    # + f32 intermediates, 2x headroom, capped at 48 MiB (leaves headroom under
    # v7x's 64 MiB physical VMEM for compiler scratch).
    x_bytes = x.dtype.itemsize
    need = (
        2 * tb * sb * E * x_bytes             # double-buffered x tiles
        + 2 * tb * o_pad * 4                  # double-buffered output tiles (f32)
        + (E * H + H * o_pad) * 2             # VMEM-resident bf16 weights
        + (H + o_pad) * 4                     # biases (f32)
        + 2 * tb * max(H, o_pad) * 4          # f32 intermediates (h, out)
    )
    vmem_limit = int(max(32 << 20, min(2 * need + (8 << 20), 48 << 20)))

    out = pl.pallas_call(
        partial(_mlp_head_kernel, tok_in_block=tok_in_block),
        out_shape=jax.ShapeDtypeStruct((B, o_pad), jnp.float32),
        grid=grid,
        in_specs=[
            # Only the seq window holding the output token is fetched per batch tile.
            pl.BlockSpec((tb, sb, E), lambda i: (i, seq_block_idx, 0)),
            # Constant block index -> weights/biases VMEM-resident across the grid.
            pl.BlockSpec((E, H), lambda i: (0, 0)),
            pl.BlockSpec((1, H), lambda i: (0, 0)),
            pl.BlockSpec((H, o_pad), lambda i: (0, 0)),
            pl.BlockSpec((1, o_pad), lambda i: (0, 0)),
        ],
        out_specs=pl.BlockSpec((tb, o_pad), lambda i: (i, 0)),
        compiler_params=pltpu.CompilerParams(
            dimension_semantics=("parallel",),
            vmem_limit_bytes=vmem_limit,
        ),
    )(x, w1, b1, w2, b2)

    # TODO(synk): if bf16 W1+W2 approach ~40 MiB (v7x residency threshold), add an
    # "arbitrary" grid axis tiling H with an f32 (tb, o_pad) scratch accumulator.
    return out[:, :out_dim]


def init_params(key, emb_dim, out_dim, hidden_dim):
    """nn.Linear default init U(-1/sqrt(fan_in), +1/sqrt(fan_in)), f32,
    weights stored transposed to (in_features, out_features)."""
    k1, k2, k3, k4 = jax.random.split(key, 4)
    lim1 = 1.0 / math.sqrt(emb_dim)
    lim2 = 1.0 / math.sqrt(hidden_dim)
    w1 = jax.random.uniform(k1, (emb_dim, hidden_dim), jnp.float32, -lim1, lim1)
    b1 = jax.random.uniform(k2, (hidden_dim,), jnp.float32, -lim1, lim1)
    w2 = jax.random.uniform(k3, (hidden_dim, out_dim), jnp.float32, -lim2, lim2)
    b2 = jax.random.uniform(k4, (out_dim,), jnp.float32, -lim2, lim2)
    return w1, b1, w2, b2


def reference_f32(x, w1, b1, w2, b2, output_token_idx):
    """Pure-f32 reference of the PyTorch forward."""
    xt = x[:, output_token_idx].astype(jnp.float32)
    h = xt @ w1.astype(jnp.float32) + b1.reshape(-1)
    h = _gelu_exact(h)
    return h @ w2.astype(jnp.float32) + b2.reshape(-1)


def reference_bf16_mxu(x, w1, b1, w2, b2, output_token_idx):
    """Reference mirroring the kernel's bf16-in / f32-accumulate MXU path."""
    f32 = jnp.float32
    xt = x[:, output_token_idx].astype(jnp.bfloat16).astype(f32)
    w1b = w1.astype(jnp.bfloat16).astype(f32)
    w2b = w2.astype(jnp.bfloat16).astype(f32)
    h = xt @ w1b + b1.reshape(-1).astype(f32)
    h = _gelu_exact(h)
    h = h.astype(jnp.bfloat16).astype(f32)
    return h @ w2b + b2.reshape(-1).astype(f32)


if __name__ == "__main__":
    # Small shapes implied by the module: (batch, seq, emb_dim) input.
    batch, seq, emb_dim = 2, 8, 32
    hidden_dim, out_dim = 64, 16
    output_token_idx = 0

    key = jax.random.PRNGKey(0)
    kx, kp = jax.random.split(key)
    x = jax.random.normal(kx, (batch, seq, emb_dim), jnp.float32)
    w1, b1, w2, b2 = init_params(kp, emb_dim, out_dim, hidden_dim)

    # One-time parameter conversion (bf16 + lane padding), outside the per-call path.
    (pw1, pb1, pw2, pb2), odim = prepare_params(w1, b1, w2, b2)

    out = frame_classification_head(x, pw1, pb1, pw2, pb2,
                                    output_token_idx=output_token_idx, out_dim=odim)
    out = jax.block_until_ready(out)
    assert out.shape == (batch, out_dim)
    assert out.dtype == jnp.float32

    # Tight check vs a reference that mirrors the kernel's bf16-MXU numerics.
    ref_mxu = reference_bf16_mxu(x, w1, b1, w2, b2, output_token_idx)
    assert jnp.allclose(out, ref_mxu, atol=2e-3, rtol=2e-3), "mismatch vs bf16-path reference"

    # Looser check vs pure-f32 PyTorch semantics.
    ref_f32 = reference_f32(x, w1, b1, w2, b2, output_token_idx)
    assert jnp.allclose(out, ref_f32, atol=5e-2, rtol=5e-2), "mismatch vs f32 reference"

    # PyTorch-style negative indexing (normalized to S-1 inside the wrapper).
    out_neg = jax.block_until_ready(
        frame_classification_head(x, pw1, pb1, pw2, pb2,
                                  output_token_idx=-1, out_dim=odim))
    ref_neg = reference_bf16_mxu(x, w1, b1, w2, b2, -1)
    assert jnp.allclose(out_neg, ref_neg, atol=2e-3, rtol=2e-3), "mismatch for negative idx"

    # Seq length not divisible by 8 -> single-row wrapper-select path.
    x7 = jax.random.normal(kx, (batch, 7, emb_dim), jnp.float32)
    out7 = jax.block_until_ready(
        frame_classification_head(x7, pw1, pb1, pw2, pb2,
                                  output_token_idx=3, out_dim=odim))
    ref7 = reference_bf16_mxu(x7, w1, b1, w2, b2, 3)
    assert jnp.allclose(out7, ref7, atol=2e-3, rtol=2e-3), "mismatch for S%8!=0 path"

    print("KERNEL_OK")
</pallas_src>

<mosaic_0001>
module attributes {stable_mosaic.version = 11 : i64} {
  func.func @_mlp_head_kernel(%arg0: i32, %arg1: memref<2x8x32xf32, #tpu.memory_space<vmem>>, %arg2: memref<32x64xbf16, #tpu.memory_space<vmem>>, %arg3: memref<1x64xf32, #tpu.memory_space<vmem>>, %arg4: memref<64x128xbf16, #tpu.memory_space<vmem>>, %arg5: memref<1x128xf32, #tpu.memory_space<vmem>>, %arg6: memref<2x128xf32, #tpu.memory_space<vmem>>) attributes {dimension_semantics = [#tpu.dimension_semantics<parallel>], iteration_bounds = array<i64: 1>, scalar_prefetch = 0 : i64, scratch_operands = 0 : i64, tpu.core_type = #tpu.core_type<tc>, window_params = [{transform_indices = @transform_0, window_bounds = array<i64: 2, 8, 32>}, {pipeline_mode = #tpu.pipeline_mode<synchronous>, transform_indices = @transform_1, window_bounds = array<i64: 32, 64>}, {pipeline_mode = #tpu.pipeline_mode<synchronous>, transform_indices = @transform_2, window_bounds = array<i64: 1, 64>}, {pipeline_mode = #tpu.pipeline_mode<synchronous>, transform_indices = @transform_3, window_bounds = array<i64: 64, 128>}, {pipeline_mode = #tpu.pipeline_mode<synchronous>, transform_indices = @transform_4, window_bounds = array<i64: 1, 128>}, {transform_indices = @transform_5, window_bounds = array<i64: 2, 128>}]} {
    %c0 = arith.constant 0 : index
    %c0_0 = arith.constant 0 : index
    %c0_1 = arith.constant 0 : index
    %0 = vector.load %arg1[%c0, %c0_0, %c0_1] : memref<2x8x32xf32, #tpu.memory_space<vmem>>, vector<2x1x32xf32>
    %1 = vector.shape_cast %0 : vector<2x1x32xf32> to vector<2x32xf32>
    %2 = arith.truncf %1 : vector<2x32xf32> to vector<2x32xbf16>
    %c0_2 = arith.constant 0 : index
    %c0_3 = arith.constant 0 : index
    %3 = vector.load %arg2[%c0_2, %c0_3] : memref<32x64xbf16, #tpu.memory_space<vmem>>, vector<32x64xbf16>
    %cst = arith.constant dense<0.000000e+00> : vector<2x64xf32>
    %4 = tpu.matmul %2, %3, %cst {dimension_numbers = #tpu.dot_dimension_numbers<[1], [0], [0], [1], [0, 0, 1, 1], [], []>} : vector<2x32xbf16>, vector<32x64xbf16>, vector<2x64xf32> -> vector<2x64xf32>
    %c0_4 = arith.constant 0 : index
    %c0_5 = arith.constant 0 : index
    %5 = vector.load %arg3[%c0_4, %c0_5] : memref<1x64xf32, #tpu.memory_space<vmem>>, vector<1x64xf32>
    %6 = vector.broadcast %5 : vector<1x64xf32> to vector<2x64xf32>
    %7 = arith.addf %4, %6 : vector<2x64xf32>
    %cst_6 = arith.constant 5.000000e-01 : f32
    %8 = vector.broadcast %cst_6 : f32 to vector<2x64xf32>
    %9 = arith.mulf %8, %7 : vector<2x64xf32>
    %cst_7 = arith.constant 0.707106769 : f32
    %10 = vector.broadcast %cst_7 : f32 to vector<2x64xf32>
    %11 = arith.mulf %7, %10 : vector<2x64xf32>
    %12 = math.erf %11 : vector<2x64xf32>
    %cst_8 = arith.constant 1.000000e+00 : f32
    %13 = vector.broadcast %cst_8 : f32 to vector<2x64xf32>
    %14 = arith.addf %13, %12 : vector<2x64xf32>
    %15 = arith.mulf %9, %14 : vector<2x64xf32>
    %16 = arith.truncf %15 : vector<2x64xf32> to vector<2x64xbf16>
    %c0_9 = arith.constant 0 : index
    %c0_10 = arith.constant 0 : index
    %17 = vector.load %arg4[%c0_9, %c0_10] : memref<64x128xbf16, #tpu.memory_space<vmem>>, vector<64x128xbf16>
    %cst_11 = arith.constant dense<0.000000e+00> : vector<2x128xf32>
    %18 = tpu.matmul %16, %17, %cst_11 {dimension_numbers = #tpu.dot_dimension_numbers<[1], [0], [0], [1], [0, 0, 1, 1], [], []>} : vector<2x64xbf16>, vector<64x128xbf16>, vector<2x128xf32> -> vector<2x128xf32>
    %c0_12 = arith.constant 0 : index
    %c0_13 = arith.constant 0 : index
    %19 = vector.load %arg5[%c0_12, %c0_13] : memref<1x128xf32, #tpu.memory_space<vmem>>, vector<1x128xf32>
    %20 = vector.broadcast %19 : vector<1x128xf32> to vector<2x128xf32>
    %21 = arith.addf %18, %20 : vector<2x128xf32>
    %c0_14 = arith.constant 0 : index
    %c0_15 = arith.constant 0 : index
    %22 = vector.load %arg6[%c0_14, %c0_15] : memref<2x128xf32, #tpu.memory_space<vmem>>, vector<2x128xf32>
    tpu.vector_store %arg6[%c0_14, %c0_15], %21 {strides = array<i32>} : memref<2x128xf32, #tpu.memory_space<vmem>>, vector<2x128xf32>,
    return
  }
  func.func @transform_0(%arg0: i32) -> (i32, i32, i32) {
    %c0_i32 = arith.constant 0 : i32
    %c0_i32_0 = arith.constant 0 : i32
    %c0_i32_1 = arith.constant 0 : i32
    return %arg0, %c0_i32, %c0_i32_0 : i32, i32, i32
  }
  func.func @transform_1(%arg0: i32) -> (i32, i32) {
    %c0_i32 = arith.constant 0 : i32
    %c0_i32_0 = arith.constant 0 : i32
    %c0_i32_1 = arith.constant 0 : i32
    return %c0_i32, %c0_i32_0 : i32, i32
  }
  func.func @transform_2(%arg0: i32) -> (i32, i32) {
    %c0_i32 = arith.constant 0 : i32
    %c0_i32_0 = arith.constant 0 : i32
    %c0_i32_1 = arith.constant 0 : i32
    return %c0_i32, %c0_i32_0 : i32, i32
  }
  func.func @transform_3(%arg0: i32) -> (i32, i32) {
    %c0_i32 = arith.constant 0 : i32
    %c0_i32_0 = arith.constant 0 : i32
    %c0_i32_1 = arith.constant 0 : i32
    return %c0_i32, %c0_i32_0 : i32, i32
  }
  func.func @transform_4(%arg0: i32) -> (i32, i32) {
    %c0_i32 = arith.constant 0 : i32
    %c0_i32_0 = arith.constant 0 : i32
    %c0_i32_1 = arith.constant 0 : i32
    return %c0_i32, %c0_i32_0 : i32, i32
  }
  func.func @transform_5(%arg0: i32) -> (i32, i32) {
    %c0_i32 = arith.constant 0 : i32
    %c0_i32_0 = arith.constant 0 : i32
    return %arg0, %c0_i32 : i32, i32
  }
}

</mosaic_0001>

<llo_original>
// kernel: frame_classification_head.1
$region0: #{frame_classification_head.1}
  #allocation0 [shape = 'u32[]', space=smem, size = 0x4, offset = 0x4, fixed_abs, tag = 'smem constant byte address 0x4 - core index']
  #allocation1 [shape = 'u32[72,128]{1,0:T(1,128)}', space=vmem, size = 0x9000, scoped, tag = 'internal scratch']
  %s0 = inlined_call_operand.hbm [shape: f32[2,8,32], index: 0, kind: input, shape index: {}]
  %s1 = inlined_call_operand.hbm [shape: bf16[32,64], index: 1, kind: input, shape index: {}]
  %s2 = inlined_call_operand.vmem [shape: f32[1,64], index: 2, kind: input, shape index: {}]
  %s3 = inlined_call_operand.hbm [shape: bf16[64,128], index: 3, kind: input, shape index: {}]
  %s4 = inlined_call_operand.vmem [shape: f32[1,128], index: 4, kind: input, shape index: {}]
  %s5 = inlined_call_operand.hbm [shape: f32[2,128], index: 5, kind: output, shape index: {}]
  %s6 = sld [smem:[#allocation0]]
  $region42: #{frame_classification_head.1} parent=0
    _
  %s8 = ssub.s32 1, %s6
  %s9 = scalar_select 0, %s8, %s6
  $region1: #{frame_classification_head.1} parent=0
    #allocation2 [shape = 'u8[8192]{0}', space=vmem, size = 0x2000, scoped, tag = 'input window, operand 0, single buffered']
    #allocation3 [shape = 's32[1]{0}', space=sflag, size = 0x4, scoped, tag = 'scoped memory for frame_classification_head.1']
    #allocation4 [shape = 's32[1]{0}', space=sflag, size = 0x4, scoped, tag = 'scoped memory for frame_classification_head.1']
    #allocation5 [shape = 'u8[8192]{0}', space=vmem, size = 0x2000, scoped, tag = 'input window, operand 1, single buffered']
    #allocation6 [shape = 's32[1]{0}', space=sflag, size = 0x4, scoped, tag = 'scoped memory for frame_classification_head.1']
    #allocation7 [shape = 'u8[16384]{0}', space=vmem, size = 0x4000, scoped, tag = 'input window, operand 3, single buffered']
    #allocation8 [shape = 'u8[1024]{0}', space=vmem, size = 0x400, scoped, tag = 'output window, operand 0, single buffered']
    %10 = vsyncpa [#allocation3], 0
    %11 = vsyncpa [#allocation6], 0
    %12 = vsyncpa [#allocation4], 0
    // Predicated region
    $region2: #{frame_classification_head.1} parent=1 // pred_check
      _
    $region3: #{frame_classification_head.1} parent=1 // pred_check_branch
      %14 = sbr.rel (0) target = $region5
    $region4: #{frame_classification_head.1} parent=1 // pred_region
      %16 = vsyncadd [#allocation3], 0
      %s17 = sshll.u32 %s0, 4
      %s18 = int_to_ptr.hbm [resolvable:$true] %s17
      %s19 = sshll.u32 [#allocation2], 4
      %s20 = int_to_ptr.vmem [resolvable:$true] %s19
      %25 = dma.hbm_to_vmem [thread:$0]  %s18, 256, %s20, [#allocation3], 128, 128, 8
    $region5: #{frame_classification_head.1} parent=1 // pred_fallthru
      _
    // Predicated region
    $region6: #{frame_classification_head.1} parent=1 // pred_check
      _
    $region7: #{frame_classification_head.1} parent=1 // pred_check_branch
      %27 = sbr.rel (0) target = $region9
    $region8: #{frame_classification_head.1} parent=1 // pred_region
      %29 = vsyncadd [#allocation6], 0
      %s30 = sshll.u32 %s1, 4
      %s31 = int_to_ptr.hbm [resolvable:$true] %s30
      %s32 = sshll.u32 [#allocation5], 4
      %s33 = int_to_ptr.vmem [resolvable:$true] %s32
      %38 = dma.hbm_to_vmem [thread:$0]  %s31, 256, %s33, [#allocation6], 64, 64, 4
    $region9: #{frame_classification_head.1} parent=1 // pred_fallthru
      _
    // Predicated region
    $region10: #{frame_classification_head.1} parent=1 // pred_check
      _
    $region11: #{frame_classification_head.1} parent=1 // pred_check_branch
      %40 = sbr.rel (0) target = $region13
    $region12: #{frame_classification_head.1} parent=1 // pred_region
      _
    $region13: #{frame_classification_head.1} parent=1 // pred_fallthru
      _
    // Predicated region
    $region14: #{frame_classification_head.1} parent=1 // pred_check
      _
    $region15: #{frame_classification_head.1} parent=1 // pred_check_branch
      %42 = sbr.rel (0) target = $region17
    $region16: #{frame_classification_head.1} parent=1 // pred_region
      %44 = vsyncadd [#allocation6], 0
      %s45 = sshll.u32 %s3, 4
      %s46 = int_to_ptr.hbm [resolvable:$true] %s45
      %s47 = sshll.u32 [#allocation7], 4
      %s48 = int_to_ptr.vmem [resolvable:$true] %s47
      %53 = dma.hbm_to_vmem [thread:$0]  %s46, 512, %s48, [#allocation6], 64, 64, 4
    $region17: #{frame_classification_head.1} parent=1 // pred_fallthru
      _
    // Predicated region
    $region18: #{frame_classification_head.1} parent=1 // pred_check
      _
    $region19: #{frame_classification_head.1} parent=1 // pred_check_branch
      %55 = sbr.rel (0) target = $region21
    $region20: #{frame_classification_head.1} parent=1 // pred_region
      _
    $region21: #{frame_classification_head.1} parent=1 // pred_fallthru
      _
    // Predicated region
    $region22: #{frame_classification_head.1} parent=1 // pred_check
      _
    $region23: #{frame_classification_head.1} parent=1 // pred_check_branch
      %57 = sbr.rel (0) target = $region25
    $region24: #{frame_classification_head.1} parent=1 // pred_region
      %59 = dma.done [#allocation3], 256
    $region25: #{frame_classification_head.1} parent=1 // pred_fallthru
      _
    // Predicated region
    $region26: #{frame_classification_head.1} parent=1 // pred_check
      _
    $region27: #{frame_classification_head.1} parent=1 // pred_check_branch
      %61 = sbr.rel (0) target = $region29
    $region28: #{frame_classification_head.1} parent=1 // pred_region
      %63 = dma.done [#allocation6], 256
    $region29: #{frame_classification_head.1} parent=1 // pred_fallthru
      _
    // Predicated region
    $region30: #{frame_classification_head.1} parent=1 // pred_check
      _
    $region31: #{frame_classification_head.1} parent=1 // pred_check_branch
      %65 = sbr.rel (0) target = $region33
    $region32: #{frame_classification_head.1} parent=1 // pred_region
      %67 = dma.done [#allocation6], 512
    $region33: #{frame_classification_head.1} parent=1 // pred_fallthru
      _
    %v69 = vld [vmem:[#allocation2] sm:$0x1]
    %v70 = vld [vmem:[#allocation2 + $0x8] sm:$0x1]
    %v71 = vpack.c.bf16 %v69, %v69
    %v72 = vpack.c.bf16 %v70, %v70
    %v73 = vld [vmem:[#allocation5] sm:$0xf]
    %v74 = vld [vmem:[#allocation5 + $0x4] sm:$0xf]
    %v75 = vld [vmem:[#allocation5 + $0x8] sm:$0xf]
    %v76 = vld [vmem:[#allocation5 + $0xc] sm:$0xf]
    %v77 = vld [vmem:[%s2] sm:$0x1]
    %v79 = vperm.slane %v77, 0
    %v83 = vunpack.c.l.b16 %v71
    %v84 = vunpack.c.l.b16 %v72
    %v85 = vrot.slane %v84, 7
    %vm86 = vcmask 1041409
    %v87 = vsel %vm86, %v85, %v83
    %v88 = vpack.c.b16 %v87, %v87
    %v93 = vunpack.c.l.b16 %v73
    %v94 = vunpack.c.l.b16 %v74
    %v95 = vunpack.c.l.b16 %v75
    %v96 = vunpack.c.l.b16 %v76
    %v97 = vpack.c.b16 %v94, %v93
    %v98 = vpack.c.b16 %v96, %v95
    %vm101 = vcmask 261120
    %v103 = vsel %vm101, %v88, 0
    %105 = vmatpush.bf16.msra.mxu0 0
    %106 = vmatpush.bf16.msra.mxu0 0
    %107 = vmatpush.bf16.msra.mxu0 0
    %108 = vmatpush.bf16.msra.mxu0 0
    %109 = vmatpush.bf16.msra.mxu0 0
    %110 = vmatpush.bf16.msra.mxu0 0
    %111 = vmatpush.bf16.msra.mxu0 %v98
    %112 = vmatpush.bf16.msra.mxu0 %v97
    %113 = vmatmul.bf16.gmra.mxu0 %v103
    %v114 = vpop.f32.mrf.mxu0
    %v115 = vadd.f32 %v79, %v114
    %v116 = vpop.f32.mrf.mxu0
    %117 = vdwg.mxu0
    %v118 = vmul.f32 %v115, 0.5
    %v119 = vmul.f32 %v115, 0.70710677
    %v120 = vmul.f32 %v119, %v119
    %v121 = vmin.f32 16.0, %v120
    %v122 = vmul.f32 %v121, 2.1237322e-06
    %v123 = vadd.f32 %v122, 0.00028619796
    %v124 = vmul.f32 %v121, %v123
    %v125 = vadd.f32 %v124, 0.0036580483
    %v126 = vmul.f32 %v121, %v125
    %v127 = vadd.f32 %v126, 0.05243302
    %v128 = vmul.f32 %v121, %v127
    %v129 = vadd.f32 %v128, 0.18741608
    %v130 = vmul.f32 %v121, %v129
    %v131 = vadd.f32 %v130, 1.1283791
    %v132 = vmul.f32 %v119, %v131
    %v133 = vmul.f32 %v121, 3.8918573e-05
    %v134 = vadd.f32 %v133, 0.001143296
    %v135 = vmul.f32 %v121, %v134
    %v136 = vadd.f32 %v135, 0.014752088
    %v137 = vmul.f32 %v121, %v136
    %v138 = vadd.f32 %v137, 0.112945676
    %v139 = vmul.f32 %v121, %v138
    %v140 = vadd.f32 %v139, 0.4994258
    %v141 = vmul.f32 %v121, %v140
    %v142 = vadd.f32 %v141, 1.0
    %v143 = vrcp.pop %v142
    %v144 = vmul.f32 %v142, %v143
    %v145 = vsub.f32 1.0, %v144
    %v146 = vmul.f32 %v143, %v145
    %v147 = vadd.f32 %v143, %v146
    %vm148 = vweird.f32 %v142
    %vm149 = vweird.f32 %v143
    %vm150 = vmor %vm148, %vm149
    %v151 = vsel %vm150, %v143, %v147
    %v152 = vand.u32 2147483647, %v142
    %vm153 = vcmp.eq.f32.partialorder %v152, 8.507059e+37
    %v154 = vand.u32 %v142, 2147483648
    %v155 = vor.u32 1.1754944e-38, %v154
    %v156 = vsel %vm153, %v155, %v151
    %v157 = vmul.f32 %v132, %v156
    %v158 = vmin.f32 %v157, 1.0
    %v159 = vmax.f32 %v158, -1.0
    %v160 = vadd.f32 %v159, 1.0
    %v161 = vmul.f32 %v118, %v160
    %v162 = vpack.c.bf16 %v161, %v161
    %v163 = vld [vmem:[#allocation7] sm:$0xf]
    %v164 = vld [vmem:[#allocation7 + $0x4] sm:$0xf]
    %v165 = vld [vmem:[#allocation7 + $0x8] sm:$0xf]
    %v166 = vld [vmem:[#allocation7 + $0xc] sm:$0xf]
    %v167 = vld [vmem:[#allocation7 + $0x10] sm:$0xf]
    %v168 = vld [vmem:[#allocation7 + $0x14] sm:$0xf]
    %v169 = vld [vmem:[#allocation7 + $0x18] sm:$0xf]
    %v170 = vld [vmem:[#allocation7 + $0x1c] sm:$0xf]
    %v171 = vld [vmem:[%s4] sm:$0x1]
    %v173 = vperm.slane %v171, 0
    %v183 = vunpack.c.l.b16 %v163
    %v184 = vunpack.c.l.b16 %v164
    %v185 = vunpack.c.l.b16 %v165
    %v186 = vunpack.c.l.b16 %v166
    %v187 = vunpack.c.l.b16 %v167
    %v188 = vunpack.c.l.b16 %v168
    %v189 = vunpack.c.l.b16 %v169
    %v190 = vunpack.c.l.b16 %v170
    %v191 = vpack.c.b16 %v184, %v183
    %v192 = vpack.c.b16 %v186, %v185
    %v193 = vpack.c.b16 %v188, %v187
    %v194 = vpack.c.b16 %v190, %v189
    %vm199 = vcmask 523264
    %v201 = vsel %vm199, %v162, 0
    %203 = vmatpush.bf16.msra.mxu0 0
    %204 = vmatpush.bf16.msra.mxu0 0
    %205 = vmatpush.bf16.msra.mxu0 0
    %206 = vmatpush.bf16.msra.mxu0 0
    %207 = vmatpush.bf16.msra.mxu0 %v194
    %208 = vmatpush.bf16.msra.mxu0 %v193
    %209 = vmatpush.bf16.msra.mxu0 %v192
    %210 = vmatpush.bf16.msra.mxu0 %v191
    %211 = vmatmul.bf16.gmra.mxu0 %v201
    %v212 = vpop.f32.mrf.mxu0
    %v213 = vadd.f32 %v173, %v212
    %v214 = vpop.f32.mrf.mxu0
    %215 = vdwg.mxu0
    %216 = vst [vmem:[#allocation8] sm:$0x3] %v213
    // Predicated region
    $region34: #{frame_classification_head.1} parent=1 // pred_check
      _
    $region35: #{frame_classification_head.1} parent=1 // pred_check_branch
      %218 = sbr.rel (0) target = $region37
    $region36: #{frame_classification_head.1} parent=1 // pred_region
      %220 = vsyncadd [#allocation4], 0
      %s222 = sshll.u32 [#allocation8], 4
      %s223 = int_to_ptr.vmem [resolvable:$true] %s222
      %s224 = sshll.u32 %s5, 4
      %s225 = int_to_ptr.hbm [resolvable:$true] %s224
      %227 = dma.vmem_to_hbm [thread:$0]  %s223, 32, %s225, [#allocation4]
    $region37: #{frame_classification_head.1} parent=1 // pred_fallthru
      _
    // Predicated region
    $region38: #{frame_classification_head.1} parent=1 // pred_check
      _
    $region39: #{frame_classification_head.1} parent=1 // pred_check_branch
      %229 = sbr.rel (0) target = $region41
    $region40: #{frame_classification_head.1} parent=1 // pred_region
      %231 = dma.done [#allocation4], 32
    $region41: #{frame_classification_head.1} parent=1 // pred_fallthru
      _
    %232 = vsyncpa [#allocation3], 1
    %233 = vsyncpa [#allocation6], 1
    %234 = vsyncpa [#allocation4], 1

</llo_original>
